<compile_context>
chip_gen: v7x
topology: tpu7x:2x2x1
jax: 0.10.0
libtpu: 0.0.40
codegen_flags: <defaults>
</compile_context>

<pallas_src>
import functools

import jax
import jax.numpy as jnp
from jax.experimental import pallas as pl
from jax.experimental.pallas import tpu as pltpu


def _round_up(x, m):
    return (x + m - 1) // m * m


def _aux_loss_fs_kernel(yp_ref, yt_ref, g_ref, out_ref, *, n_total):
    yp = yp_ref[...]                                # (tn, c) native dtype
    yt = yt_ref[...]                                # (tn, 1) int32
    g = g_ref[...].astype(jnp.float32)              # (tn, 1) f32

    tn, c = yp.shape

    # First-index argmax over the class (lane) axis, matching jnp/torch argmax.
    maxv = jnp.max(yp, axis=-1, keepdims=True)                               # (tn, 1)
    cls = jax.lax.broadcasted_iota(jnp.int32, (tn, c), 1)                    # (tn, c)
    pred = jnp.min(jnp.where(yp == maxv, cls, c), axis=-1, keepdims=True)    # (tn, 1)

    right = pred == yt                                                       # (tn, 1)

    # BCE with PyTorch's log clamp at -100; one log per row.
    p = jnp.where(right, g, 1.0 - g)
    loss = -jnp.maximum(jnp.log(p), -100.0)                                  # (tn, 1)

    # Mask padded rows of the ragged last tile (padded block data is undefined).
    row0 = pl.program_id(0) * tn
    rows = row0 + jax.lax.broadcasted_iota(jnp.int32, (tn, 1), 0)
    loss = jnp.where(rows < n_total, loss, 0.0)

    partial = jnp.sum(loss)                                                  # f32 scalar

    # Lane-dense (1, 128) store: lane 0 carries this tile's partial sum, rest are 0.
    lane = jax.lax.broadcasted_iota(jnp.int32, (1, 128), 1)
    out_ref[...] = jnp.where(lane == 0, partial, 0.0)


def aux_loss_fs(y_pred, g, y_true, *, block_rows=None):
    """y_pred: (N, C) float scores, g: N elements in (0,1) (any shape),
    y_true: (N,) integer class labels. Returns scalar f32 loss (mean BCE)."""
    n, c = y_pred.shape
    g2 = g.reshape(n, 1)                          # g.view(-1); dtype preserved
    yt2 = y_true.reshape(n, 1).astype(jnp.int32)

    # Tile sizing: ~2 MiB y_pred block (lane-padded) per buffer, 8-aligned rows,
    # capped at 2048 rows. Fits comfortably under every chip's scoped VMEM budget.
    lane_pad = _round_up(max(c, 1), 128)
    itemsize = jnp.dtype(y_pred.dtype).itemsize
    if block_rows is None:
        rows = (2 * 1024 * 1024) // (lane_pad * itemsize)
        rows = max(8, (rows // 8) * 8)
        block_rows = min(rows, 2048)
    else:
        block_rows = max(8, (block_rows // 8) * 8)

    if n <= block_rows:
        tn = n                                    # single block == full array dims
    else:
        tn = block_rows                           # multiple of 8; last tile is masked
    num_tiles = pl.cdiv(n, tn)

    kernel = functools.partial(_aux_loss_fs_kernel, n_total=n)

    partials = pl.pallas_call(
        kernel,
        out_shape=jax.ShapeDtypeStruct((1, 128 * num_tiles), jnp.float32),
        grid=(num_tiles,),
        in_specs=[
            pl.BlockSpec((tn, c), lambda i: (i, 0)),
            pl.BlockSpec((tn, 1), lambda i: (i, 0)),
            pl.BlockSpec((tn, 1), lambda i: (i, 0)),
        ],
        out_specs=pl.BlockSpec((1, 128), lambda i: (0, i)),
        compiler_params=pltpu.CompilerParams(
            dimension_semantics=("parallel",),
            vmem_limit_bytes=32 * 1024 * 1024,
        ),
    )(y_pred, yt2, g2)

    return jnp.sum(partials) / jnp.float32(n)


def _reference(y_pred, g, y_true):
    g = g.reshape(-1).astype(jnp.float32)
    right = (jnp.argmax(y_pred, axis=-1) == y_true).astype(jnp.float32)
    log_g = jnp.maximum(jnp.log(g), -100.0)
    log_1mg = jnp.maximum(jnp.log(1.0 - g), -100.0)
    return jnp.mean(-(right * log_g + (1.0 - right) * log_1mg))


if __name__ == "__main__":
    key = jax.random.PRNGKey(0)
    k1, k2, k3, k4, k5, k6 = jax.random.split(key, 6)

    # Small shapes consistent with the module: 8 samples, 10 classes.
    N, C = 8, 10
    y_pred = jax.random.normal(k1, (N, C), dtype=jnp.float32)                     # scores
    g = jax.nn.sigmoid(jax.random.normal(k2, (N, 1), dtype=jnp.float32))          # (0,1)
    y_true = jax.random.randint(k3, (N,), 0, C, dtype=jnp.int32)

    loss = aux_loss_fs(y_pred, g, y_true)
    jax.block_until_ready(loss)
    ref = _reference(y_pred, g, y_true)
    assert jnp.allclose(loss, ref, atol=1e-5, rtol=1e-5), (loss, ref)

    # Multi-tile + ragged-tail path (grid > 1, N not a multiple of the block).
    N2, C2 = 300, 10
    y_pred2 = jax.random.normal(k4, (N2, C2), dtype=jnp.float32)
    g2 = jax.nn.sigmoid(jax.random.normal(k5, (N2,), dtype=jnp.float32))
    y_true2 = jax.random.randint(k6, (N2,), 0, C2, dtype=jnp.int32)

    loss2 = aux_loss_fs(y_pred2, g2, y_true2, block_rows=128)
    jax.block_until_ready(loss2)
    ref2 = _reference(y_pred2, g2, y_true2)
    assert jnp.allclose(loss2, ref2, atol=1e-5, rtol=1e-5), (loss2, ref2)

    print("KERNEL_OK")
</pallas_src>

<mosaic_0001>
module attributes {stable_mosaic.version = 11 : i64} {
  func.func @_aux_loss_fs_kernel(%arg0: i32, %arg1: memref<8x10xf32, #tpu.memory_space<vmem>>, %arg2: memref<8x1xi32, #tpu.memory_space<vmem>>, %arg3: memref<8x1xf32, #tpu.memory_space<vmem>>, %arg4: memref<1x128xf32, #tpu.memory_space<vmem>>) attributes {dimension_semantics = [#tpu.dimension_semantics<parallel>], iteration_bounds = array<i64: 1>, scalar_prefetch = 0 : i64, scratch_operands = 0 : i64, tpu.core_type = #tpu.core_type<tc>, window_params = [{transform_indices = @transform_0, window_bounds = array<i64: 8, 10>}, {transform_indices = @transform_1, window_bounds = array<i64: 8, 1>}, {transform_indices = @transform_2, window_bounds = array<i64: 8, 1>}, {transform_indices = @transform_3, window_bounds = array<i64: 1, 128>}]} {
    %c0 = arith.constant 0 : index
    %c0_0 = arith.constant 0 : index
    %0 = vector.load %arg1[%c0, %c0_0] : memref<8x10xf32, #tpu.memory_space<vmem>>, vector<8x10xf32>
    %c0_1 = arith.constant 0 : index
    %c0_2 = arith.constant 0 : index
    %1 = vector.load %arg2[%c0_1, %c0_2] : memref<8x1xi32, #tpu.memory_space<vmem>>, vector<8x1xi32>
    %c0_3 = arith.constant 0 : index
    %c0_4 = arith.constant 0 : index
    %2 = vector.load %arg3[%c0_3, %c0_4] : memref<8x1xf32, #tpu.memory_space<vmem>>, vector<8x1xf32>
    %cst = arith.constant dense<0xFF800000> : vector<8xf32>
    %3 = vector.multi_reduction <maximumf>, %0, %cst [1] : vector<8x10xf32> to vector<8xf32>
    %4 = vector.shape_cast %3 : vector<8xf32> to vector<8x1xf32>
    %5 = tpu.iota {dimensions = array<i32: 1>} : vector<8x10xi32>
    %6 = vector.broadcast %4 : vector<8x1xf32> to vector<8x10xf32>
    %7 = arith.cmpf oeq, %0, %6 : vector<8x10xf32>
    %c10_i32 = arith.constant 10 : i32
    %8 = vector.broadcast %c10_i32 : i32 to vector<8x10xi32>
    %9 = arith.select %7, %5, %8 : vector<8x10xi1>, vector<8x10xi32>
    %cst_5 = arith.constant dense<2147483647> : vector<8xi32>
    %10 = vector.multi_reduction <minsi>, %9, %cst_5 [1] : vector<8x10xi32> to vector<8xi32>
    %11 = vector.shape_cast %10 : vector<8xi32> to vector<8x1xi32>
    %12 = arith.cmpi eq, %11, %1 : vector<8x1xi32>
    %cst_6 = arith.constant 1.000000e+00 : f32
    %13 = vector.broadcast %cst_6 : f32 to vector<8x1xf32>
    %14 = arith.subf %13, %2 : vector<8x1xf32>
    %15 = arith.select %12, %2, %14 : vector<8x1xi1>, vector<8x1xf32>
    %16 = math.log %15 : vector<8x1xf32>
    %cst_7 = arith.constant -1.000000e+02 : f32
    %17 = vector.broadcast %cst_7 : f32 to vector<8x1xf32>
    %18 = arith.maximumf %16, %17 : vector<8x1xf32>
    %cst_8 = arith.constant 0.000000e+00 : f32
    %19 = vector.broadcast %cst_8 : f32 to vector<8x1xf32>
    %20 = arith.subf %19, %18 : vector<8x1xf32>
    %c8_i32 = arith.constant 8 : i32
    %21 = arith.muli %arg0, %c8_i32 : i32
    %22 = tpu.iota {dimensions = array<i32: 0>} : vector<8x1xi32>
    %23 = vector.broadcast %21 : i32 to vector<8x1xi32>
    %24 = arith.addi %23, %22 : vector<8x1xi32>
    %c8_i32_9 = arith.constant 8 : i32
    %25 = vector.broadcast %c8_i32_9 : i32 to vector<8x1xi32>
    %26 = arith.cmpi slt, %24, %25 : vector<8x1xi32>
    %cst_10 = arith.constant 0.000000e+00 : f32
    %27 = vector.broadcast %cst_10 : f32 to vector<8x1xf32>
    %28 = arith.select %26, %20, %27 : vector<8x1xi1>, vector<8x1xf32>
    %29 = vector.shape_cast %28 : vector<8x1xf32> to vector<1x8x1xf32>
    %cst_11 = arith.constant dense<0.000000e+00> : vector<1xf32>
    %30 = vector.multi_reduction <add>, %29, %cst_11 [1, 2] : vector<1x8x1xf32> to vector<1xf32>
    %31 = vector.shape_cast %30 : vector<1xf32> to vector<1x1x1xf32>
    %32 = vector.extract %31[0, 0, 0] : f32 from vector<1x1x1xf32>
    %33 = tpu.iota {dimensions = array<i32: 1>} : vector<1x128xi32>
    %c0_i32 = arith.constant 0 : i32
    %34 = vector.broadcast %c0_i32 : i32 to vector<1x128xi32>
    %35 = arith.cmpi eq, %33, %34 : vector<1x128xi32>
    %cst_12 = arith.constant 0.000000e+00 : f32
    %36 = vector.broadcast %32 : f32 to vector<1x128xf32>
    %37 = vector.broadcast %cst_12 : f32 to vector<1x128xf32>
    %38 = arith.select %35, %36, %37 : vector<1x128xi1>, vector<1x128xf32>
    %c0_13 = arith.constant 0 : index
    %c0_14 = arith.constant 0 : index
    %39 = vector.load %arg4[%c0_13, %c0_14] : memref<1x128xf32, #tpu.memory_space<vmem>>, vector<1x128xf32>
    tpu.vector_store %arg4[%c0_13, %c0_14], %38 {strides = array<i32>} : memref<1x128xf32, #tpu.memory_space<vmem>>, vector<1x128xf32>,
    return
  }
  func.func @transform_0(%arg0: i32) -> (i32, i32) {
    %c0_i32 = arith.constant 0 : i32
    %c0_i32_0 = arith.constant 0 : i32
    return %arg0, %c0_i32 : i32, i32
  }
  func.func @transform_1(%arg0: i32) -> (i32, i32) {
    %c0_i32 = arith.constant 0 : i32
    %c0_i32_0 = arith.constant 0 : i32
    return %arg0, %c0_i32 : i32, i32
  }
  func.func @transform_2(%arg0: i32) -> (i32, i32) {
    %c0_i32 = arith.constant 0 : i32
    %c0_i32_0 = arith.constant 0 : i32
    return %arg0, %c0_i32 : i32, i32
  }
  func.func @transform_3(%arg0: i32) -> (i32, i32) {
    %c0_i32 = arith.constant 0 : i32
    %c0_i32_0 = arith.constant 0 : i32
    return %c0_i32, %arg0 : i32, i32
  }
}

</mosaic_0001>

<llo_original>
// kernel: tpu_custom_call.1
$region0: #{tpu_custom_call.1}
  #allocation0 [shape = 'u32[]', space=smem, size = 0x4, offset = 0x4, fixed_abs, tag = 'smem constant byte address 0x4 - core index']
  #allocation1 [shape = 'u32[144,128]{1,0:T(1,128)}', space=vmem, size = 0x12000, scoped, tag = 'internal scratch']
  %s0 = inlined_call_operand.vmem [shape: f32[8,10], index: 0, kind: input, shape index: {}]
  %s1 = inlined_call_operand.vmem [shape: s32[8,1], index: 1, kind: input, shape index: {}]
  %s2 = inlined_call_operand.vmem [shape: f32[8,1], index: 2, kind: input, shape index: {}]
  %s3 = inlined_call_operand.hbm [shape: f32[1,128], index: 3, kind: output, shape index: {}]
  %s4 = sld [smem:[#allocation0]]
  $region22: #{tpu_custom_call.1} parent=0
    _
  %s6 = ssub.s32 1, %s4
  %s7 = scalar_select 0, %s6, %s4
  $region1: #{tpu_custom_call.1} parent=0
    #allocation2 [shape = 'u8[512]{0}', space=vmem, size = 0x400, scoped, tag = 'output window, operand 0, single buffered']
    #allocation3 [shape = 's32[1]{0}', space=sflag, size = 0x4, scoped, tag = 'scoped memory for tpu_custom_call.1']
    %8 = vsyncpa [#allocation3], 0
    // Predicated region
    $region2: #{tpu_custom_call.1} parent=1 // pred_check
      _
    $region3: #{tpu_custom_call.1} parent=1 // pred_check_branch
      %10 = sbr.rel (0) target = $region5
    $region4: #{tpu_custom_call.1} parent=1 // pred_region
      _
    $region5: #{tpu_custom_call.1} parent=1 // pred_fallthru
      _
    // Predicated region
    $region6: #{tpu_custom_call.1} parent=1 // pred_check
      _
    $region7: #{tpu_custom_call.1} parent=1 // pred_check_branch
      %12 = sbr.rel (0) target = $region9
    $region8: #{tpu_custom_call.1} parent=1 // pred_region
      _
    $region9: #{tpu_custom_call.1} parent=1 // pred_fallthru
      _
    // Predicated region
    $region10: #{tpu_custom_call.1} parent=1 // pred_check
      _
    $region11: #{tpu_custom_call.1} parent=1 // pred_check_branch
      %14 = sbr.rel (0) target = $region13
    $region12: #{tpu_custom_call.1} parent=1 // pred_region
      _
    $region13: #{tpu_custom_call.1} parent=1 // pred_fallthru
      _
    %v15 = vld [vmem:[%s0] sm:$0xff]
    %v16 = vld [vmem:[%s1] sm:$0xff]
    %v17 = vld [vmem:[%s2] sm:$0xff]
    %vm18 = vcmask 80896
    %v19 = vsel %vm18, %v15, -inf
    %20 = vmax.xlane.f32.xlu0 %v19
    %v21 = vpop.xlane.xlu0 %20
    %v22 = vlaneseq
    %v23 = vand.u32 %v22, 127
    %vm24 = vcmp.eq.f32.partialorder %v15, %v21
    %v25 = vsel %vm24, %v23, 10
    %v26 = vsel %vm18, %v25, 2147483647
    %v27 = vand.u32 %v26, 65535
    %v28 = vshra.s32 %v26, 16
    %v29 = vcvt.s32.f32 %v27
    %v30 = vcvt.s32.f32 %v28
    %31 = vmin.xlane.f32.xlu0 %v30
    %v32 = vpop.xlane.xlu0 %31
    %vm33 = vcmp.eq.f32.partialorder %v30, %v32
    %v34 = vsel %vm33, %v29, inf
    %35 = vmin.xlane.f32.xlu0 %v34
    %v36 = vpop.xlane.xlu0 %35
    %v37 = vcvt.f32.s32 %v36
    %v38 = vcvt.f32.s32 %v32
    %v39 = vshll.u32 %v38, 16
    %v40 = vadd.s32 %v39, %v37
    %vm41 = vcmp.eq.s32.totalorder %v40, %v16
    %v42 = vsub.f32 1.0, %v17
    %v43 = vsel %vm41, %v17, %v42
    %v44 = vlog2.pop %v43
    %v45 = vmul.f32 %v44, 0.6931472
    %v46 = vmax.f32 %v45, -100.0
    %v47 = vsub.f32 0.0, %v46
    %s48 = smul.u32 0, 8
    %v49 = vlaneseq
    %v50 = vshrl.u32 %v49, 7
    %v51 = vstv %s48
    %v52 = vadd.s32 %v51, %v50
    %vm53 = vcmp.lt.s32.totalorder %v52, 8
    %v54 = vsel %vm53, %v47, 0.0
    %vm55 = vcmask 7168
    %v56 = vsel %vm55, %v54, 0.0
    %57 = vadd.xlane.f32.xlu0 %v56
    %v58 = vpop.xlane.xlu0 %57
    %v59 = vrot.slane %v58, 4
    %v60 = vadd.f32 %v58, %v59
    %v61 = vrot.slane %v60, 2
    %v62 = vadd.f32 %v60, %v61
    %v63 = vrot.slane %v62, 1
    %v64 = vadd.f32 %v62, %v63
    %s65 = vtos %v64
    %vm66 = vcmp.eq.s32.totalorder %v23, 0
    %v67 = vstv %s65
    %v68 = vsel %vm66, %v67, 0.0
    %69 = vst [vmem:[#allocation2] sm:$0x1] %v68
    // Predicated region
    $region14: #{tpu_custom_call.1} parent=1 // pred_check
      _
    $region15: #{tpu_custom_call.1} parent=1 // pred_check_branch
      %71 = sbr.rel (0) target = $region17
    $region16: #{tpu_custom_call.1} parent=1 // pred_region
      %s73 = ssub.s32 16, 16
      %74 = vsyncadd [#allocation3], %s73
      %s76 = sshll.u32 [#allocation2], 4
      %s77 = int_to_ptr.vmem [resolvable:$true] %s76
      %79 = dma.vmem_to_hbm [thread:$0]  %s77, 16, %s3, [#allocation3]
    $region17: #{tpu_custom_call.1} parent=1 // pred_fallthru
      _
    // Predicated region
    $region18: #{tpu_custom_call.1} parent=1 // pred_check
      _
    $region19: #{tpu_custom_call.1} parent=1 // pred_check_branch
      %81 = sbr.rel (0) target = $region21
    $region20: #{tpu_custom_call.1} parent=1 // pred_region
      %82 = dma.done [#allocation3], 16
    $region21: #{tpu_custom_call.1} parent=1 // pred_fallthru
      _
    %83 = vsyncpa [#allocation3], 1

</llo_original>
